<compile_context>
chip_gen: v7x
topology: tpu7x:2x2x1
jax: 0.10.0
libtpu: 0.0.40
codegen_flags: <defaults>
</compile_context>

<pallas_src>
import math

import jax
import jax.numpy as jnp
import numpy as np
from jax.experimental import pallas as pl
from jax.experimental.pallas import tpu as pltpu


def _vmem_budget_bytes():
    """Generation-aware scoped-VMEM budget (headroom below physical VMEM)."""
    try:
        phys = pltpu.get_tpu_info().vmem_capacity_bytes
    except Exception:
        phys = 64 * 1024 * 1024  # conservative: smallest per-TC VMEM (v7x)
    # ~55% of physical: room for Mosaic-internal scratch and the buffers we do
    # not model exactly.  v5e/v6e (128 MiB) -> ~70 MiB; v7x (64 MiB) -> ~35 MiB.
    return min(int(phys * 0.55), 100 * 1024 * 1024)


def _pick_tile_n(N, S, C, eps_itemsize, budget_bytes, max_tile_n):
    """Largest lane tile (multiple of 128) whose working set fits the budget."""
    S2 = S // 2

    def tile_bytes(t):
        # double-buffered inputs (mean + sigma + target + eps slab)
        in_b = 2 * (2 * C * 4 + 4 + S2 * C * eps_itemsize) * t
        # resident accumulator (x2 headroom for the writeback buffer)
        out_b = 2 * S * 4 * t
        # in-kernel f32 temporaries (pert, logits, exp, picked, lse, ...)
        tmp_b = (3 * S * C + S2 * C + 4 * S) * 4 * t
        return in_b + out_b + tmp_b

    n128 = max(128, ((N + 127) // 128) * 128)
    t = (min(max_tile_n, n128) // 128) * 128
    while t > 128:
        if tile_bytes(t) <= budget_bytes:
            return t
        t -= 128
    return 128


def ssn_mc_loss_pallas(logit_mean, sigma, eps, target, num_mc_samples,
                       max_tile_n=8192, eps_storage_dtype=jnp.bfloat16):
    """Pallas implementation of StochasticSegmentationNetworkLossMCIntegral.

    logit_mean : (B, C, H, W)        f32 -- mean of the logit distribution
    sigma      : (B, C, H, W)        f32 -- per-logit stddev (diagonal Gaussian)
    eps        : (S//2, B, C, H, W)  f32 -- standard-normal draws (rsample noise)
    target     : (B, H, W)           int -- class indices in [0, C)

    eps_storage_dtype: dtype of the eps HBM stream (default bf16 = fast path,
    halves the dominant DMA traffic); math is always f32 inside the kernel.
    Pass jnp.float32 (or None) for bit-exact parity with an f32 reference.
    """
    B, C, H, W = logit_mean.shape
    N = H * W
    S = int(num_mc_samples)
    assert S % 2 == 0, "num_mc_samples must be even"
    assert C >= 2
    S2 = S // 2

    eps_dtype = jnp.dtype(eps_storage_dtype) if eps_storage_dtype is not None \
        else jnp.dtype(jnp.float32)

    budget = _vmem_budget_bytes()
    tile_n = _pick_tile_n(N, S, C, eps_dtype.itemsize, budget, max_tile_n)
    Np = ((N + tile_n - 1) // tile_n) * tile_n   # padded voxel count
    n_tiles = Np // tile_n
    pad = Np - N

    mean_f = logit_mean.reshape(B, C, N).astype(jnp.float32)
    sigma_f = sigma.reshape(B, C, N).astype(jnp.float32)
    eps_f = eps.reshape(S2, B, C, N).astype(eps_dtype)
    tgt_f = target.reshape(B, 1, N).astype(jnp.int32)

    if pad > 0:
        # zero-pad: padded logits are all-zero (finite log-softmax), padded
        # target is class 0 (in range); contributions are masked to 0 in-kernel.
        mean_f = jnp.pad(mean_f, ((0, 0), (0, 0), (0, pad)))
        sigma_f = jnp.pad(sigma_f, ((0, 0), (0, 0), (0, pad)))
        eps_f = jnp.pad(eps_f, ((0, 0), (0, 0), (0, 0), (0, pad)))
        tgt_f = jnp.pad(tgt_f, ((0, 0), (0, 0), (0, pad)))

    grid = (B, n_tiles)  # reduction (voxel-tile) axis last

    def kernel(mean_ref, sigma_ref, eps_ref, tgt_ref, out_ref):
        n = pl.program_id(1)

        # zero-init the resident per-batch accumulator once per batch row
        @pl.when(n == 0)
        def _():
            out_ref[...] = jnp.zeros_like(out_ref)

        mean = mean_ref[...]                               # (C, tile_n) f32
        sig = sigma_ref[...]                               # (C, tile_n) f32
        e = eps_ref[...].astype(jnp.float32)               # (S2, C, tile_n)
        tgt = tgt_ref[...]                                 # (1, tile_n) int32

        pert = sig[None] * e                               # (S2, C, tile_n)

        # one-hot class mask at the target, shared by both antithetic branches
        cls = jax.lax.broadcasted_iota(jnp.int32, (C, tile_n), 0)
        mask = cls == tgt                                  # (C, tile_n)

        # gathered target logit computed once, reused for +/- branches
        sel_mean = jnp.sum(jnp.where(mask, mean, 0.0), axis=0,
                           keepdims=True)                  # (1, tile_n)
        sel_pert = jnp.sum(jnp.where(mask[None], pert, 0.0), axis=1)  # (S2, t)
        picked = jnp.concatenate([sel_mean + sel_pert,
                                  sel_mean - sel_pert], axis=0)       # (S, t)

        # fused antithetic log-sum-exp over classes
        logits = jnp.concatenate([mean[None] + pert,
                                  mean[None] - pert], axis=0)         # (S, C, t)
        m = jnp.max(logits, axis=1, keepdims=True)                    # (S, 1, t)
        sumexp = jnp.sum(jnp.exp(logits - m), axis=1)                 # (S, t)
        lse = m[:, 0, :] + jnp.log(sumexp)                            # (S, t)

        logp = picked - lse                                           # (S, t)

        if Np > N:  # mask padded voxels so they contribute exactly 0
            lane = jax.lax.broadcasted_iota(jnp.int32, (1, tile_n), 1)
            logp = jnp.where(n * tile_n + lane < N, logp, 0.0)

        # lane-dense, full-block (8-sublane when S==8) accumulate
        out_ref[...] = out_ref[...] + logp

    cost = pl.CostEstimate(
        flops=int(10 * B * S * C * Np),
        transcendentals=int(B * S * (C + 1) * Np),
        bytes_accessed=int(mean_f.size * 4 + sigma_f.size * 4 + tgt_f.size * 4
                           + eps_f.size * eps_dtype.itemsize
                           + B * S * tile_n * 4),
    )

    per_lane = pl.pallas_call(
        kernel,
        out_shape=jax.ShapeDtypeStruct((B, S, tile_n), jnp.float32),
        grid_spec=pltpu.PrefetchScalarGridSpec(
            num_scalar_prefetch=0,
            grid=grid,
            in_specs=[
                # logit mean  (B, C, Np) -- fetched once per (b, tile)
                pl.BlockSpec((pl.Squeezed(), C, tile_n), lambda b, n: (b, 0, n)),
                # sigma       (B, C, Np)
                pl.BlockSpec((pl.Squeezed(), C, tile_n), lambda b, n: (b, 0, n)),
                # eps         (S/2, B, C, Np) -- whole sample axis per tile
                pl.BlockSpec((S2, pl.Squeezed(), C, tile_n),
                             lambda b, n: (0, b, 0, n)),
                # target      (B, 1, Np)
                pl.BlockSpec((pl.Squeezed(), 1, tile_n), lambda b, n: (b, 0, n)),
            ],
            # per-batch accumulator resident in VMEM across the voxel tiles;
            # blocks are disjoint per b -> safe for megacore "parallel"
            out_specs=pl.BlockSpec((pl.Squeezed(), S, tile_n),
                                   lambda b, n: (b, 0, 0)),
        ),
        compiler_params=pltpu.CompilerParams(
            dimension_semantics=("parallel", "arbitrary"),
            vmem_limit_bytes=budget),
        cost_estimate=cost,
    )(mean_f, sigma_f, eps_f, tgt_f)

    # tiny epilogue: (B, S, tile_n) -> scalar.  logsumexp is permutation-
    # invariant over the sample axis, so the [+, -] stacking order is fine.
    per_sb = per_lane.sum(axis=-1)                       # (B, S) voxel sums
    loglik = jnp.mean(jax.nn.logsumexp(per_sb, axis=1) - math.log(S))
    return -loglik / N


def ssn_mc_loss_reference(logit_mean, sigma, eps, target, num_mc_samples):
    """Pure-JAX reference mirroring the PyTorch module exactly."""
    B, C, H, W = logit_mean.shape
    N = H * W
    S = num_mc_samples
    mean = logit_mean.reshape(B, C, N).astype(jnp.float32)
    sig = sigma.reshape(B, C, N).astype(jnp.float32)
    e = eps.reshape(S // 2, B, C, N).astype(jnp.float32)
    pert = sig[None] * e
    samples = jnp.concatenate([mean[None] + pert, mean[None] - pert], axis=0)
    logp = jax.nn.log_softmax(samples, axis=2)                      # (S,B,C,N)
    tgt = jnp.broadcast_to(target.reshape(1, B, 1, N).astype(jnp.int32),
                           (S, B, 1, N))
    picked = jnp.take_along_axis(logp, tgt, axis=2)[:, :, 0, :]     # (S,B,N)
    per_sb = picked.sum(axis=-1)                                    # (S,B)
    loglik = jnp.mean(jax.nn.logsumexp(per_sb, axis=0) - math.log(S))
    return -loglik / N


if __name__ == "__main__":
    key = jax.random.PRNGKey(0)
    B, C, H, W = 2, 4, 16, 16
    S = 8  # num_mc_samples (must be even)

    k1, k2, k3, k4 = jax.random.split(key, 4)
    logit_mean = jax.random.normal(k1, (B, C, H, W), jnp.float32)
    # deterministic, positive per-logit stddev (synthetic distribution params)
    sigma = jax.nn.softplus(jax.random.normal(k2, (B, C, H, W), jnp.float32) - 1.0)
    eps = jax.random.normal(k3, (S // 2, B, C, H, W), jnp.float32)
    target = jax.random.randint(k4, (B, H, W), 0, C, jnp.int32)

    # 1) fast path (default: bf16 eps stream).  Compare against a reference fed
    #    the identically-rounded noise so the check isolates the kernel math.
    loss_fast = jax.block_until_ready(
        ssn_mc_loss_pallas(logit_mean, sigma, eps, target, S))
    eps_rt = eps.astype(jnp.bfloat16).astype(jnp.float32)
    ref_fast = jax.block_until_ready(
        ssn_mc_loss_reference(logit_mean, sigma, eps_rt, target, S))
    np.testing.assert_allclose(np.asarray(loss_fast), np.asarray(ref_fast),
                               rtol=1e-4, atol=1e-4)

    # 2) exact-precision path (f32 eps) against the f32 reference.
    loss_f32 = jax.block_until_ready(
        ssn_mc_loss_pallas(logit_mean, sigma, eps, target, S,
                           eps_storage_dtype=jnp.float32))
    ref_f32 = jax.block_until_ready(
        ssn_mc_loss_reference(logit_mean, sigma, eps, target, S))
    np.testing.assert_allclose(np.asarray(loss_f32), np.asarray(ref_f32),
                               rtol=1e-4, atol=1e-4)

    # 3) non-128-divisible spatial size exercises the padding + lane-mask path.
    B2, C2, H2, W2, S2s = 2, 3, 9, 11, 4
    j1, j2, j3, j4 = jax.random.split(jax.random.PRNGKey(1), 4)
    lm2 = jax.random.normal(j1, (B2, C2, H2, W2), jnp.float32)
    sg2 = jax.nn.softplus(jax.random.normal(j2, (B2, C2, H2, W2), jnp.float32) - 1.0)
    ep2 = jax.random.normal(j3, (S2s // 2, B2, C2, H2, W2), jnp.float32)
    tg2 = jax.random.randint(j4, (B2, H2, W2), 0, C2, jnp.int32)
    loss_pad = jax.block_until_ready(
        ssn_mc_loss_pallas(lm2, sg2, ep2, tg2, S2s,
                           eps_storage_dtype=jnp.float32))
    ref_pad = jax.block_until_ready(
        ssn_mc_loss_reference(lm2, sg2, ep2, tg2, S2s))
    np.testing.assert_allclose(np.asarray(loss_pad), np.asarray(ref_pad),
                               rtol=1e-4, atol=1e-4)

    print("KERNEL_OK")
</pallas_src>

<mosaic_0001>
module attributes {stable_mosaic.version = 11 : i64} {
  func.func @kernel(%arg0: i32, %arg1: i32, %arg2: memref<1x4x256xf32, #tpu.memory_space<vmem>>, %arg3: memref<1x4x256xf32, #tpu.memory_space<vmem>>, %arg4: memref<4x1x4x256xbf16, #tpu.memory_space<vmem>>, %arg5: memref<1x1x256xi32, #tpu.memory_space<vmem>>, %arg6: memref<1x8x256xf32, #tpu.memory_space<vmem>>) attributes {dimension_semantics = [#tpu.dimension_semantics<parallel>, #tpu.dimension_semantics<arbitrary>], iteration_bounds = array<i64: 2, 1>, scalar_prefetch = 0 : i64, scratch_operands = 0 : i64, tpu.core_type = #tpu.core_type<tc>, window_params = [{transform_indices = @transform_0, window_bounds = array<i64: 1, 4, 256>}, {transform_indices = @transform_1, window_bounds = array<i64: 1, 4, 256>}, {transform_indices = @transform_2, window_bounds = array<i64: 4, 1, 4, 256>}, {transform_indices = @transform_3, window_bounds = array<i64: 1, 1, 256>}, {transform_indices = @transform_4, window_bounds = array<i64: 1, 8, 256>}]} {
    %c0_i32 = arith.constant 0 : i32
    %0 = arith.cmpi eq, %arg1, %c0_i32 : i32
    %1 = arith.extui %0 : i1 to i32
    %c0_i32_0 = arith.constant 0 : i32
    %2 = arith.cmpi ne, %1, %c0_i32_0 : i32
    scf.if %2 {
      %cst_24 = arith.constant 0.000000e+00 : f32
      %56 = vector.broadcast %cst_24 : f32 to vector<8x256xf32>
      %c0_25 = arith.constant 0 : index
      %c0_26 = arith.constant 0 : index
      %c0_27 = arith.constant 0 : index
      %57 = vector.load %arg6[%c0_25, %c0_26, %c0_27] : memref<1x8x256xf32, #tpu.memory_space<vmem>>, vector<1x8x256xf32>
      %58 = vector.shape_cast %57 : vector<1x8x256xf32> to vector<8x256xf32>
      %59 = vector.shape_cast %56 : vector<8x256xf32> to vector<1x8x256xf32>
      tpu.vector_store %arg6[%c0_25, %c0_26, %c0_27], %59 {strides = array<i32>} : memref<1x8x256xf32, #tpu.memory_space<vmem>>, vector<1x8x256xf32>,
    } else {
    }
    %c0 = arith.constant 0 : index
    %c0_1 = arith.constant 0 : index
    %c0_2 = arith.constant 0 : index
    %3 = vector.load %arg2[%c0, %c0_1, %c0_2] : memref<1x4x256xf32, #tpu.memory_space<vmem>>, vector<1x4x256xf32>
    %4 = vector.shape_cast %3 : vector<1x4x256xf32> to vector<4x256xf32>
    %c0_3 = arith.constant 0 : index
    %c0_4 = arith.constant 0 : index
    %c0_5 = arith.constant 0 : index
    %5 = vector.load %arg3[%c0_3, %c0_4, %c0_5] : memref<1x4x256xf32, #tpu.memory_space<vmem>>, vector<1x4x256xf32>
    %6 = vector.shape_cast %5 : vector<1x4x256xf32> to vector<4x256xf32>
    %c0_6 = arith.constant 0 : index
    %c0_7 = arith.constant 0 : index
    %c0_8 = arith.constant 0 : index
    %c0_9 = arith.constant 0 : index
    %7 = vector.load %arg4[%c0_6, %c0_7, %c0_8, %c0_9] : memref<4x1x4x256xbf16, #tpu.memory_space<vmem>>, vector<4x1x4x256xbf16>
    %8 = vector.shape_cast %7 : vector<4x1x4x256xbf16> to vector<4x4x256xbf16>
    %9 = arith.extf %8 : vector<4x4x256xbf16> to vector<4x4x256xf32>
    %c0_10 = arith.constant 0 : index
    %c0_11 = arith.constant 0 : index
    %c0_12 = arith.constant 0 : index
    %10 = vector.load %arg5[%c0_10, %c0_11, %c0_12] : memref<1x1x256xi32, #tpu.memory_space<vmem>>, vector<1x1x256xi32>
    %11 = vector.shape_cast %10 : vector<1x1x256xi32> to vector<1x256xi32>
    %12 = vector.shape_cast %6 : vector<4x256xf32> to vector<1x4x256xf32>
    %13 = vector.broadcast %12 : vector<1x4x256xf32> to vector<4x4x256xf32>
    %14 = arith.mulf %13, %9 : vector<4x4x256xf32>
    %15 = tpu.iota {dimensions = array<i32: 0>} : vector<4x256xi32>
    %16 = vector.broadcast %11 : vector<1x256xi32> to vector<4x256xi32>
    %17 = arith.cmpi eq, %15, %16 : vector<4x256xi32>
    %cst = arith.constant 0.000000e+00 : f32
    %18 = vector.broadcast %cst : f32 to vector<4x256xf32>
    %19 = arith.select %17, %4, %18 : vector<4x256xi1>, vector<4x256xf32>
    %cst_13 = arith.constant dense<0.000000e+00> : vector<256xf32>
    %20 = vector.multi_reduction <add>, %19, %cst_13 [0] : vector<4x256xf32> to vector<256xf32>
    %21 = vector.shape_cast %20 : vector<256xf32> to vector<1x256xf32>
    %22 = vector.shape_cast %17 : vector<4x256xi1> to vector<1x4x256xi1>
    %cst_14 = arith.constant 0.000000e+00 : f32
    %23 = vector.shape_cast %22 : vector<1x4x256xi1> to vector<1x4x256xi1>
    %24 = vector.broadcast %23 : vector<1x4x256xi1> to vector<4x4x256xi1>
    %25 = vector.broadcast %cst_14 : f32 to vector<4x4x256xf32>
    %26 = arith.select %24, %14, %25 : vector<4x4x256xi1>, vector<4x4x256xf32>
    %cst_15 = arith.constant dense<0.000000e+00> : vector<4x256xf32>
    %27 = vector.multi_reduction <add>, %26, %cst_15 [1] : vector<4x4x256xf32> to vector<4x256xf32>
    %28 = vector.broadcast %21 : vector<1x256xf32> to vector<4x256xf32>
    %29 = arith.addf %28, %27 : vector<4x256xf32>
    %30 = vector.broadcast %21 : vector<1x256xf32> to vector<4x256xf32>
    %31 = arith.subf %30, %27 : vector<4x256xf32>
    %32 = tpu.concatenate %29, %31 in 0 : vector<4x256xf32>, vector<4x256xf32> -> vector<8x256xf32>
    %33 = vector.shape_cast %4 : vector<4x256xf32> to vector<1x4x256xf32>
    %34 = vector.broadcast %33 : vector<1x4x256xf32> to vector<4x4x256xf32>
    %35 = arith.addf %34, %14 : vector<4x4x256xf32>
    %36 = vector.shape_cast %4 : vector<4x256xf32> to vector<1x4x256xf32>
    %37 = vector.broadcast %36 : vector<1x4x256xf32> to vector<4x4x256xf32>
    %38 = arith.subf %37, %14 : vector<4x4x256xf32>
    %39 = tpu.concatenate %35, %38 in 0 : vector<4x4x256xf32>, vector<4x4x256xf32> -> vector<8x4x256xf32>
    %cst_16 = arith.constant dense<0xFF800000> : vector<8x256xf32>
    %40 = vector.multi_reduction <maximumf>, %39, %cst_16 [1] : vector<8x4x256xf32> to vector<8x256xf32>
    %41 = vector.shape_cast %40 : vector<8x256xf32> to vector<8x1x256xf32>
    %42 = vector.broadcast %41 : vector<8x1x256xf32> to vector<8x4x256xf32>
    %43 = arith.subf %39, %42 : vector<8x4x256xf32>
    %44 = math.exp %43 : vector<8x4x256xf32>
    %cst_17 = arith.constant dense<0.000000e+00> : vector<8x256xf32>
    %45 = vector.multi_reduction <add>, %44, %cst_17 [1] : vector<8x4x256xf32> to vector<8x256xf32>
    %46 = vector.shape_cast %41 : vector<8x1x256xf32> to vector<8x256xf32>
    %47 = math.log %45 : vector<8x256xf32>
    %48 = arith.addf %46, %47 : vector<8x256xf32>
    %49 = arith.subf %32, %48 : vector<8x256xf32>
    %c0_18 = arith.constant 0 : index
    %c0_19 = arith.constant 0 : index
    %c0_20 = arith.constant 0 : index
    %50 = vector.load %arg6[%c0_18, %c0_19, %c0_20] : memref<1x8x256xf32, #tpu.memory_space<vmem>>, vector<1x8x256xf32>
    %51 = vector.shape_cast %50 : vector<1x8x256xf32> to vector<8x256xf32>
    %52 = arith.addf %51, %49 : vector<8x256xf32>
    %c0_21 = arith.constant 0 : index
    %c0_22 = arith.constant 0 : index
    %c0_23 = arith.constant 0 : index
    %53 = vector.load %arg6[%c0_21, %c0_22, %c0_23] : memref<1x8x256xf32, #tpu.memory_space<vmem>>, vector<1x8x256xf32>
    %54 = vector.shape_cast %53 : vector<1x8x256xf32> to vector<8x256xf32>
    %55 = vector.shape_cast %52 : vector<8x256xf32> to vector<1x8x256xf32>
    tpu.vector_store %arg6[%c0_21, %c0_22, %c0_23], %55 {strides = array<i32>} : memref<1x8x256xf32, #tpu.memory_space<vmem>>, vector<1x8x256xf32>,
    return
  }
  func.func @transform_0(%arg0: i32, %arg1: i32) -> (i32, i32, i32) {
    %c0_i32 = arith.constant 0 : i32
    %c0_i32_0 = arith.constant 0 : i32
    return %arg0, %c0_i32, %arg1 : i32, i32, i32
  }
  func.func @transform_1(%arg0: i32, %arg1: i32) -> (i32, i32, i32) {
    %c0_i32 = arith.constant 0 : i32
    %c0_i32_0 = arith.constant 0 : i32
    return %arg0, %c0_i32, %arg1 : i32, i32, i32
  }
  func.func @transform_2(%arg0: i32, %arg1: i32) -> (i32, i32, i32, i32) {
    %c0_i32 = arith.constant 0 : i32
    %c0_i32_0 = arith.constant 0 : i32
    %c0_i32_1 = arith.constant 0 : i32
    return %c0_i32, %arg0, %c0_i32_0, %arg1 : i32, i32, i32, i32
  }
  func.func @transform_3(%arg0: i32, %arg1: i32) -> (i32, i32, i32) {
    %c0_i32 = arith.constant 0 : i32
    %c0_i32_0 = arith.constant 0 : i32
    return %arg0, %c0_i32, %arg1 : i32, i32, i32
  }
  func.func @transform_4(%arg0: i32, %arg1: i32) -> (i32, i32, i32) {
    %c0_i32 = arith.constant 0 : i32
    %c0_i32_0 = arith.constant 0 : i32
    %c0_i32_1 = arith.constant 0 : i32
    return %arg0, %c0_i32, %c0_i32_0 : i32, i32, i32
  }
}

</mosaic_0001>

<llo_original>
// kernel: tpu_custom_call.1
$region0: #{tpu_custom_call.1}
  #allocation0 [shape = 'u32[]', space=smem, size = 0x4, offset = 0x4, fixed_abs, tag = 'smem constant byte address 0x4 - core index']
  #allocation1 [shape = 'u32[144,128]{1,0:T(1,128)}', space=vmem, size = 0x12000, scoped, tag = 'internal scratch']
  %s0 = inlined_call_operand.hbm [shape: f32[2,4,256], index: 0, kind: input, shape index: {}]
  %s1 = inlined_call_operand.hbm [shape: f32[2,4,256], index: 1, kind: input, shape index: {}]
  %s2 = inlined_call_operand.hbm [shape: bf16[4,2,4,256], index: 2, kind: input, shape index: {}]
  %s3 = inlined_call_operand.vmem [shape: s32[2,1,256], index: 3, kind: input, shape index: {}]
  %s4 = inlined_call_operand.hbm [shape: f32[2,8,256], index: 4, kind: output, shape index: {}]
  %s5 = sld [smem:[#allocation0]]
  $region65: #{tpu_custom_call.1} parent=0
    _
  %s7 = ssub.s32 1, %s5
  %s8 = scalar_select 0, %s7, %s5
  $region1: #{tpu_custom_call.1} parent=0
    #allocation2 [shape = 'u8[8192]{0}', space=vmem, size = 0x2000, scoped, tag = 'input window, operand 0']
    #allocation3 [shape = 's32[2]{0}', space=sflag, size = 0x8, scoped, tag = 'scoped memory for tpu_custom_call.1']
    #allocation4 [shape = 's32[2]{0}', space=sflag, size = 0x8, scoped, tag = 'scoped memory for tpu_custom_call.1']
    #allocation5 [shape = 'u8[8192]{0}', space=vmem, size = 0x2000, scoped, tag = 'input window, operand 1']
    #allocation6 [shape = 's32[2]{0}', space=sflag, size = 0x8, scoped, tag = 'scoped memory for tpu_custom_call.1']
    #allocation7 [shape = 'u8[16384]{0}', space=vmem, size = 0x4000, scoped, tag = 'input window, operand 2']
    #allocation8 [shape = 'u8[16384]{0}', space=vmem, size = 0x4000, scoped, tag = 'output window, operand 0']
    %9 = vsyncpa [#allocation3], 0
    %s10 = scalar_lea.sflag [#allocation3], 1
    %11 = vsyncpa %s10, 0
    %12 = vsyncpa [#allocation6], 0
    %s13 = scalar_lea.sflag [#allocation6], 1
    %14 = vsyncpa %s13, 0
    %15 = vsyncpa [#allocation4], 0
    %s16 = scalar_lea.sflag [#allocation4], 1
    %17 = vsyncpa %s16, 0
    loop: start=0, step=1, limit=4
    $region2: #{tpu_custom_call.1} parent=1 // loop_pre_header
      _
    $region3: #{tpu_custom_call.1} parent=1 // loop_header
      %s19 = sphi 0, %s23
      %p20 = scmp.ge.s32.totalorder %s19, 4
      %s26 = sphi 0, %s38
      %s27 = sphi 0, %s34
      %s28 = sphi 0, %s26
      %s29 = sphi 0, %s27
      %s30 = sphi 0, %s28
      %s31 = sphi 0, %s29
      %s43 = sphi 0, %s45
      %s46 = sphi 0, %s43
      %s47 = sphi 0, %s46
      %s63 = sphi 0, %s47
      %s71 = sphi 0, %s73
      %s74 = sphi 0, %s71
      %s75 = sphi 0, %s74
      %s91 = sphi 0, %s75
      %s99 = sphi 0, %s101
      %s102 = sphi 0, %s99
      %s103 = sphi 0, %s102
      %s119 = sphi 0, %s103
      %s127 = sphi 0, %s129
      %s130 = sphi 0, %s127
      %s131 = sphi 0, %s130
      %s147 = sphi 0, %s131
      %s153 = sphi 0, %s155
      %s156 = sphi 0, %s153
      %s157 = sphi 0, %s156
      %s173 = sphi 0, %s157
    $region4: #{tpu_custom_call.1} parent=1 // loop_header_branch
      %22 = sbr.rel (%p20) target = $region8
    $region5: #{tpu_custom_call.1} parent=1 // loop_body
      %s24 = ssub.s32 %s19, 1
      %s25 = ssub.s32 %s19, 2
      %s32 = sadd.s32 1, %s27
      %p33 = scmp.ge.s32.totalorder %s32, 1
      %s34 = scalar_select %p33, 0, %s32
      %s35 = sadd.s32 1, %s26
      %s36 = scalar_select %p33, %s35, %s26
      %p37 = scmp.ge.s32.totalorder %s36, 2
      %s38 = scalar_select %p37, 0, %s36
      %s39 = ssub.s32 %s26, %s38
      %s40 = ssub.s32 %s27, %s34
      %s41 = sor.u32 %s39, %s40
      %p42 = scmp.eq.s32.totalorder %s41, 0
      %s44 = sadd.s32 %s43, 1
      %s45 = scalar_select %p42, %s43, %s44
      %p48 = pneg %p42
      %p49 = scmp.eq.s32.totalorder %s19, 1
      %p50 = por %p48, %p49
      %p51 = scmp.ne.s32.totalorder %s43, %s46
      %p52 = scmp.eq.s32.totalorder %s19, 0
      %p53 = por %p51, %p52
      %p54 = scmp.ne.s32.totalorder %s43, %s46
      %p55 = scmp.eq.s32.totalorder %s24, 1
      %p56 = por %p54, %p55
      %p57 = scmp.ne.s32.totalorder %s46, %s47
      %p58 = scmp.eq.s32.totalorder %s24, 0
      %p59 = por %p57, %p58
      %p60 = scmp.ne.s32.totalorder %s46, %s47
      %p61 = scmp.eq.s32.totalorder %s25, 1
      %p62 = por %p60, %p61
      %p64 = scmp.ne.s32.totalorder %s47, %s63
      %p65 = scmp.eq.s32.totalorder %s25, 0
      %p66 = por %p64, %p65
      %s67 = ssub.s32 %s26, %s38
      %s68 = ssub.s32 %s27, %s34
      %s69 = sor.u32 %s67, %s68
      %p70 = scmp.eq.s32.totalorder %s69, 0
      %s72 = sadd.s32 %s71, 1
      %s73 = scalar_select %p70, %s71, %s72
      %p76 = pneg %p70
      %p77 = scmp.eq.s32.totalorder %s19, 1
      %p78 = por %p76, %p77
      %p79 = scmp.ne.s32.totalorder %s71, %s74
      %p80 = scmp.eq.s32.totalorder %s19, 0
      %p81 = por %p79, %p80
      %p82 = scmp.ne.s32.totalorder %s71, %s74
      %p83 = scmp.eq.s32.totalorder %s24, 1
      %p84 = por %p82, %p83
      %p85 = scmp.ne.s32.totalorder %s74, %s75
      %p86 = scmp.eq.s32.totalorder %s24, 0
      %p87 = por %p85, %p86
      %p88 = scmp.ne.s32.totalorder %s74, %s75
      %p89 = scmp.eq.s32.totalorder %s25, 1
      %p90 = por %p88, %p89
      %p92 = scmp.ne.s32.totalorder %s75, %s91
      %p93 = scmp.eq.s32.totalorder %s25, 0
      %p94 = por %p92, %p93
      %s95 = ssub.s32 %s26, %s38
      %s96 = ssub.s32 %s27, %s34
      %s97 = sor.u32 %s95, %s96
      %p98 = scmp.eq.s32.totalorder %s97, 0
      %s100 = sadd.s32 %s99, 1
      %s101 = scalar_select %p98, %s99, %s100
      %p104 = pneg %p98
      %p105 = scmp.eq.s32.totalorder %s19, 1
      %p106 = por %p104, %p105
      %p107 = scmp.ne.s32.totalorder %s99, %s102
      %p108 = scmp.eq.s32.totalorder %s19, 0
      %p109 = por %p107, %p108
      %p110 = scmp.ne.s32.totalorder %s99, %s102
      %p111 = scmp.eq.s32.totalorder %s24, 1
      %p112 = por %p110, %p111
      %p113 = scmp.ne.s32.totalorder %s102, %s103
      %p114 = scmp.eq.s32.totalorder %s24, 0
      %p115 = por %p113, %p114
      %p116 = scmp.ne.s32.totalorder %s102, %s103
      %p117 = scmp.eq.s32.totalorder %s25, 1
      %p118 = por %p116, %p117
      %p120 = scmp.ne.s32.totalorder %s103, %s119
      %p121 = scmp.eq.s32.totalorder %s25, 0
      %p122 = por %p120, %p121
      %s123 = ssub.s32 %s26, %s38
      %s124 = ssub.s32 %s27, %s34
      %s125 = sor.u32 %s123, %s124
      %p126 = scmp.eq.s32.totalorder %s125, 0
      %s128 = sadd.s32 %s127, 1
      %s129 = scalar_select %p126, %s127, %s128
      %p132 = pneg %p126
      %p133 = scmp.eq.s32.totalorder %s19, 1
      %p134 = por %p132, %p133
      %p135 = scmp.ne.s32.totalorder %s127, %s130
      %p136 = scmp.eq.s32.totalorder %s19, 0
      %p137 = por %p135, %p136
      %p138 = scmp.ne.s32.totalorder %s127, %s130
      %p139 = scmp.eq.s32.totalorder %s24, 1
      %p140 = por %p138, %p139
      %p141 = scmp.ne.s32.totalorder %s130, %s131
      %p142 = scmp.eq.s32.totalorder %s24, 0
      %p143 = por %p141, %p142
      %p144 = scmp.ne.s32.totalorder %s130, %s131
      %p145 = scmp.eq.s32.totalorder %s25, 1
      %p146 = por %p144, %p145
      %p148 = scmp.ne.s32.totalorder %s131, %s147
      %p149 = scmp.eq.s32.totalorder %s25, 0
      %p150 = por %p148, %p149
      %s151 = ssub.s32 %s26, %s38
      %p152 = scmp.eq.s32.totalorder %s151, 0
      %s154 = sadd.s32 %s153, 1
      %s155 = scalar_select %p152, %s153, %s154
      %p158 = pneg %p152
      %p159 = scmp.eq.s32.totalorder %s19, 1
      %p160 = por %p158, %p159
      %p161 = scmp.ne.s32.totalorder %s153, %s156
      %p162 = scmp.eq.s32.totalorder %s19, 0
      %p163 = por %p161, %p162
      %p164 = scmp.ne.s32.totalorder %s153, %s156
      %p165 = scmp.eq.s32.totalorder %s24, 1
      %p166 = por %p164, %p165
      %p167 = scmp.ne.s32.totalorder %s156, %s157
      %p168 = scmp.eq.s32.totalorder %s24, 0
      %p169 = por %p167, %p168
      %p170 = scmp.ne.s32.totalorder %s156, %s157
      %p171 = scmp.eq.s32.totalorder %s25, 1
      %p172 = por %p170, %p171
      %p174 = scmp.ne.s32.totalorder %s157, %s173
      %p175 = scmp.eq.s32.totalorder %s25, 0
      %p176 = por %p174, %p175
      %p177 = scmp.le.s32.totalorder 1, %s19
      %p178 = scmp.lt.s32.totalorder %s19, 3
      %p179 = pnand %p177, %p178
      %p180 = pneg %p179
      // Predicated region
      $region9: #{tpu_custom_call.1} parent=5 // pred_check
        _
      $region10: #{tpu_custom_call.1} parent=5 // pred_check_branch
        %182 = sbr.rel (%p179) target = $region12
      $region11: #{tpu_custom_call.1} parent=5 // pred_region
        %s183 = ssub.s32 %s19, 1
      $region12: #{tpu_custom_call.1} parent=5 // pred_fallthru
        _
      %p184 = scmp.lt.s32.totalorder %s19, 2
      // Predicated region
      $region13: #{tpu_custom_call.1} parent=5 // pred_check
        %p185 = pneg %p184
      $region14: #{tpu_custom_call.1} parent=5 // pred_check_branch
        %187 = sbr.rel (%p185) target = $region16
      $region15: #{tpu_custom_call.1} parent=5 // pred_region
        // Predicated region
        $region17: #{tpu_custom_call.1} parent=15 // pred_check
          %p188 = pneg %p53
        $region18: #{tpu_custom_call.1} parent=15 // pred_check_branch
          %190 = sbr.rel (%p188) target = $region20
        $region19: #{tpu_custom_call.1} parent=15 // pred_region
          %s191 = sand.u32 %s43, 1
          %s192 = scalar_lea.sflag [#allocation3], %s191
          %s193 = sand.u32 %s43, 1
          %s194 = smul.addr %s193, 8
          %s195 = scalar_lea.vmem [#allocation2], %s194
          %s196 = smul.u32 2, %s27
          %s198 = ssub.s32 128, 128
          %199 = vsyncadd %s192, %s198
          %s200 = smul.addr %s26, 2
          %s201 = sadd.s32 %s196, %s200
          %s202 = smul.addr %s201, 64
          %s203 = scalar_lea.hbm %s0, %s202
          %s205 = sshll.u32 %s195, 4
          %s206 = int_to_ptr.vmem [resolvable:$true] %s205
          %208 = dma.hbm_to_vmem [thread:$0]  %s203, 128, %s206, %s192
        $region20: #{tpu_custom_call.1} parent=15 // pred_fallthru
          _
        // Predicated region
        $region21: #{tpu_custom_call.1} parent=15 // pred_check
          %p209 = pneg %p81
        $region22: #{tpu_custom_call.1} parent=15 // pred_check_branch
          %211 = sbr.rel (%p209) target = $region24
        $region23: #{tpu_custom_call.1} parent=15 // pred_region
          %s212 = sand.u32 %s19, 1
          %s213 = scalar_lea.sflag [#allocation6], %s212
          %s214 = sand.u32 %s71, 1
          %s215 = smul.addr %s214, 8
          %s216 = scalar_lea.vmem [#allocation5], %s215
          %s217 = smul.u32 2, %s27
          %s219 = ssub.s32 128, 128
          %220 = vsyncadd %s213, %s219
          %s221 = smul.addr %s26, 2
          %s222 = sadd.s32 %s217, %s221
          %s223 = smul.addr %s222, 64
          %s224 = scalar_lea.hbm %s1, %s223
          %s226 = sshll.u32 %s216, 4
          %s227 = int_to_ptr.vmem [resolvable:$true] %s226
          %229 = dma.hbm_to_vmem [thread:$0]  %s224, 128, %s227, %s213
        $region24: #{tpu_custom_call.1} parent=15 // pred_fallthru
          _
        // Predicated region
        $region25: #{tpu_custom_call.1} parent=15 // pred_check
          %p230 = pneg %p109
        $region26: #{tpu_custom_call.1} parent=15 // pred_check_branch
          %232 = sbr.rel (%p230) target = $region28
        $region27: #{tpu_custom_call.1} parent=15 // pred_region
          %s233 = sand.u32 %s19, 1
          %s234 = scalar_lea.sflag [#allocation6], %s233
          %s235 = sand.u32 %s99, 1
          %s236 = smul.addr %s235, 16
          %s237 = scalar_lea.vmem [#allocation7], %s236
          %s238 = smul.u32 2, %s27
          %s240 = ssub.s32 256, 256
          %241 = vsyncadd %s234, %s240
          %s242 = smul.addr %s26, 2
          %s243 = sadd.s32 %s238, %s242
          %s244 = smul.addr %s243, 32
          %s245 = scalar_lea.hbm %s2, %s244
          %s246 = sshll.u32 %s237, 4
          %s247 = int_to_ptr.vmem [resolvable:$true] %s246
          %252 = dma.hbm_to_vmem [thread:$0]  %s245, 256, %s247, %s234, 128, 64, 4
        $region28: #{tpu_custom_call.1} parent=15 // pred_fallthru
          _
        // Predicated region
        $region29: #{tpu_custom_call.1} parent=15 // pred_check
          %p253 = pneg %p137
        $region30: #{tpu_custom_call.1} parent=15 // pred_check_branch
          %255 = sbr.rel (%p253) target = $region32
        $region31: #{tpu_custom_call.1} parent=15 // pred_region
          %s256 = smul.u32 2, %s27
          %p257 = scmp.lt.s32.totalorder %s26, 1
          %s258 = scalar_select %p257, %s26, 1
          %p259 = scmp.lt.s32.totalorder %s256, 1
          %s260 = scalar_select %p259, %s256, 1
          %s261 = smul.addr %s258, 2
          %s262 = sadd.s32 %s260, %s261
          %s263 = scalar_lea.vmem %s3, %s262
          %s264 = smul.u32 2, %s27
        $region32: #{tpu_custom_call.1} parent=15 // pred_fallthru
          _
      $region16: #{tpu_custom_call.1} parent=5 // pred_fallthru
        _
      %p265 = scmp.le.s32.totalorder 1, %s19
      %p266 = scmp.lt.s32.totalorder %s19, 3
      %p267 = pnand %p265, %p266
      %p268 = pneg %p267
      // Predicated region
      $region33: #{tpu_custom_call.1} parent=5 // pred_check
        _
      $region34: #{tpu_custom_call.1} parent=5 // pred_check_branch
        %270 = sbr.rel (%p267) target = $region36
      $region35: #{tpu_custom_call.1} parent=5 // pred_region
        %s271 = ssub.s32 %s19, 1
        %s272 = sand.u32 %s46, 1
        %s273 = scalar_lea.sflag [#allocation3], %s272
        %s274 = sand.u32 %s46, 1
        %s275 = smul.addr %s274, 8
        %s276 = scalar_lea.vmem [#allocation2], %s275
        // Predicated region
        $region37: #{tpu_custom_call.1} parent=35 // pred_check
          %p277 = pneg %p59
        $region38: #{tpu_custom_call.1} parent=35 // pred_check_branch
          %279 = sbr.rel (%p277) target = $region40
        $region39: #{tpu_custom_call.1} parent=35 // pred_region
          %280 = dma.done %s273, 128
        $region40: #{tpu_custom_call.1} parent=35 // pred_fallthru
          _
        %s281 = sand.u32 %s24, 1
        %s282 = scalar_lea.sflag [#allocation6], %s281
        %s283 = sand.u32 %s74, 1
        %s284 = smul.addr %s283, 8
        %s285 = scalar_lea.vmem [#allocation5], %s284
        // Predicated region
        $region41: #{tpu_custom_call.1} parent=35 // pred_check
          %p286 = pneg %p87
        $region42: #{tpu_custom_call.1} parent=35 // pred_check_branch
          %288 = sbr.rel (%p286) target = $region44
        $region43: #{tpu_custom_call.1} parent=35 // pred_region
          %289 = dma.done %s282, 128
        $region44: #{tpu_custom_call.1} parent=35 // pred_fallthru
          _
        %s290 = sand.u32 %s24, 1
        %s291 = scalar_lea.sflag [#allocation6], %s290
        %s292 = sand.u32 %s102, 1
        %s293 = smul.addr %s292, 16
        %s294 = scalar_lea.vmem [#allocation7], %s293
        // Predicated region
        $region45: #{tpu_custom_call.1} parent=35 // pred_check
          %p295 = pneg %p115
        $region46: #{tpu_custom_call.1} parent=35 // pred_check_branch
          %297 = sbr.rel (%p295) target = $region48
        $region47: #{tpu_custom_call.1} parent=35 // pred_region
          %298 = dma.done %s291, 256
        $region48: #{tpu_custom_call.1} parent=35 // pred_fallthru
          _
        %s299 = sand.u32 %s46, 1
        %s300 = scalar_lea.sflag [#allocation3], %s299
        %s301 = sand.u32 %s46, 1
        %s302 = smul.addr %s301, 8
        %s303 = scalar_lea.vmem [#allocation2], %s302
        %p304 = pneg %p59
        %p305 = pneg %p56
        %s306 = sand.u32 %s24, 1
        %s307 = scalar_lea.sflag [#allocation6], %s306
        %s308 = sand.u32 %s74, 1
        %s309 = smul.addr %s308, 8
        %s310 = scalar_lea.vmem [#allocation5], %s309
        %p311 = pneg %p87
        %p312 = pneg %p84
        %s313 = sand.u32 %s24, 1
        %s314 = scalar_lea.sflag [#allocation6], %s313
        %s315 = sand.u32 %s102, 1
        %s316 = smul.addr %s315, 16
        %s317 = scalar_lea.vmem [#allocation7], %s316
        %p318 = pneg %p115
        %p319 = pneg %p112
        %s320 = smul.u32 2, %s29
        %p321 = scmp.lt.s32.totalorder %s28, 1
        %s322 = scalar_select %p321, %s28, 1
        %p323 = scmp.lt.s32.totalorder %s320, 1
        %s324 = scalar_select %p323, %s320, 1
        %s325 = smul.addr %s322, 2
        %s326 = sadd.s32 %s324, %s325
        %s327 = scalar_lea.vmem %s3, %s326
        %p328 = pneg %p143
        %p329 = pneg %p140
        %p330 = pneg %p169
        %p331 = pneg %p166
        %s332 = sand.u32 %s156, 1
        %s333 = scalar_lea.sflag [#allocation4], %s332
        %s334 = sand.u32 %s156, 1
        %s335 = smul.addr %s334, 16
        %s336 = scalar_lea.vmem [#allocation8], %s335
        %s337 = smul.u32 2, %s29
        %s338 = smul.u32 2, %s29
        %s339 = smul.u32 2, %s29
        %s340 = smul.u32 2, %s29
        %p341 = scmp.lt.s32.totalorder %s28, 1
        %s342 = scalar_select %p341, %s28, 1
        %p343 = scmp.lt.s32.totalorder %s340, 1
        %s344 = scalar_select %p343, %s340, 1
        %s345 = smul.addr %s342, 2
        %s346 = sadd.s32 %s344, %s345
        %s347 = scalar_lea.vmem %s3, %s346
        %s348 = smul.u32 2, %s29
        %p349 = scmp.eq.s32.totalorder %s29, 0
        // Predicated region
        $region49: #{tpu_custom_call.1} parent=35 // pred_check
          %p350 = pneg %p349
        $region50: #{tpu_custom_call.1} parent=35 // pred_check_branch
          %352 = sbr.rel (%p350) target = $region52
        $region51: #{tpu_custom_call.1} parent=35 // pred_region
          %353 = vst [vmem:[%s336] sm:$0xff] 0.0
          %354 = vst [vmem:[%s336 + $0x8] sm:$0xff] 0.0
        $region52: #{tpu_custom_call.1} parent=35 // pred_fallthru
          _
        %v355 = vld [vmem:[%s276] sm:$0xff]
        %v356 = vld [vmem:[%s285] sm:$0xff]
        %v357 = vld [vmem:[%s294] sm:$0xf]
        %v358 = vld [vmem:[%s294 + $0x4] sm:$0xf]
        %v359 = vld [vmem:[%s294 + $0x8] sm:$0xf]
        %v360 = vld [vmem:[%s294 + $0xc] sm:$0xf]
        %v361 = vunpack.c.l.bf16 %v357
        %v362 = vunpack.c.l.bf16 %v358
        %v363 = vunpack.c.l.bf16 %v359
        %v364 = vunpack.c.l.bf16 %v360
        %v365 = vld [vmem:[%s347] sm:$0x3]
        %v366 = vmul.f32 %v356, %v361
        %v367 = vmul.f32 %v356, %v362
        %v368 = vmul.f32 %v356, %v363
        %v369 = vmul.f32 %v356, %v364
        %v370 = vlaneseq
        %v371 = vshrl.u32 %v370, 7
        %v372 = vlaneseq
        %v373 = vshrl.u32 %v372, 7
        %v374 = vsub.s32 0, %v373
        %v375 = vrot.slane %v365, %v374
        %v376 = vlaneseq
        %v377 = vshrl.u32 %v376, 7
        %v378 = vsub.s32 1, %v377
        %v379 = vrot.slane %v365, %v378
        %vm380 = vcmp.eq.s32.totalorder %v371, %v375
        %vm381 = vcmp.eq.s32.totalorder %v371, %v379
        %v383 = vcombine.high %v355, %v355
        %v385 = vsel %vm380, %v355, 0.0
        %v386 = vsel %vm381, %v383, 0.0
        %vm387 = vcmask 1043456
        %v388 = vsel %vm387, %v385, 0.0
        %v389 = vrot.slane %v388, 4
        %v390 = vadd.f32 %v388, %v389
        %v391 = vrot.slane %v390, 2
        %v392 = vadd.f32 %v390, %v391
        %v393 = vrot.slane %v392, 1
        %v394 = vadd.f32 %v392, %v393
        %v395 = vsel %vm387, %v386, 0.0
        %v396 = vrot.slane %v395, 4
        %v397 = vadd.f32 %v395, %v396
        %v398 = vrot.slane %v397, 2
        %v399 = vadd.f32 %v397, %v398
        %v400 = vrot.slane %v399, 1
        %v401 = vadd.f32 %v399, %v400
        %v402 = vsel %vm380, 1, 0
        %v403 = vsel %vm381, 1, 0
        %vm404 = vcmp.eq.s32.totalorder %v402, 1
        %vm405 = vcmp.eq.s32.totalorder %v403, 1
        %v410 = vcombine.high %v366, %v366
        %v411 = vcombine.high %v367, %v367
        %v412 = vcombine.high %v368, %v368
        %v413 = vcombine.high %v369, %v369
        %v418 = vsel %vm404, %v366, 0.0
        %v419 = vsel %vm405, %v410, 0.0
        %v420 = vsel %vm404, %v367, 0.0
        %v421 = vsel %vm405, %v411, 0.0
        %v422 = vsel %vm404, %v368, 0.0
        %v423 = vsel %vm405, %v412, 0.0
        %v424 = vsel %vm404, %v369, 0.0
        %v425 = vsel %vm405, %v413, 0.0
        %v426 = vsel %vm387, %v418, 0.0
        %v427 = vrot.slane %v426, 4
        %v428 = vadd.f32 %v426, %v427
        %v429 = vrot.slane %v428, 2
        %v430 = vadd.f32 %v428, %v429
        %v431 = vrot.slane %v430, 1
        %v432 = vadd.f32 %v430, %v431
        %v433 = vsel %vm387, %v419, 0.0
        %v434 = vrot.slane %v433, 4
        %v435 = vadd.f32 %v433, %v434
        %v436 = vrot.slane %v435, 2
        %v437 = vadd.f32 %v435, %v436
        %v438 = vrot.slane %v437, 1
        %v439 = vadd.f32 %v437, %v438
        %v440 = vsel %vm387, %v420, 0.0
        %v441 = vrot.slane %v440, 4
        %v442 = vadd.f32 %v440, %v441
        %v443 = vrot.slane %v442, 2
        %v444 = vadd.f32 %v442, %v443
        %v445 = vrot.slane %v444, 1
        %v446 = vadd.f32 %v444, %v445
        %v447 = vsel %vm387, %v421, 0.0
        %v448 = vrot.slane %v447, 4
        %v449 = vadd.f32 %v447, %v448
        %v450 = vrot.slane %v449, 2
        %v451 = vadd.f32 %v449, %v450
        %v452 = vrot.slane %v451, 1
        %v453 = vadd.f32 %v451, %v452
        %v454 = vsel %vm387, %v422, 0.0
        %v455 = vrot.slane %v454, 4
        %v456 = vadd.f32 %v454, %v455
        %v457 = vrot.slane %v456, 2
        %v458 = vadd.f32 %v456, %v457
        %v459 = vrot.slane %v458, 1
        %v460 = vadd.f32 %v458, %v459
        %v461 = vsel %vm387, %v423, 0.0
        %v462 = vrot.slane %v461, 4
        %v463 = vadd.f32 %v461, %v462
        %v464 = vrot.slane %v463, 2
        %v465 = vadd.f32 %v463, %v464
        %v466 = vrot.slane %v465, 1
        %v467 = vadd.f32 %v465, %v466
        %v468 = vsel %vm387, %v424, 0.0
        %v469 = vrot.slane %v468, 4
        %v470 = vadd.f32 %v468, %v469
        %v471 = vrot.slane %v470, 2
        %v472 = vadd.f32 %v470, %v471
        %v473 = vrot.slane %v472, 1
        %v474 = vadd.f32 %v472, %v473
        %v475 = vsel %vm387, %v425, 0.0
        %v476 = vrot.slane %v475, 4
        %v477 = vadd.f32 %v475, %v476
        %v478 = vrot.slane %v477, 2
        %v479 = vadd.f32 %v477, %v478
        %v480 = vrot.slane %v479, 1
        %v481 = vadd.f32 %v479, %v480
        %vm490 = vcmask 1041409
        %v491 = vsel %vm490, %v446, %v432
        %vm492 = vcmask 1042434
        %v493 = vsel %vm492, %v460, %v491
        %vm494 = vcmask 1043459
        %v495 = vsel %vm494, %v474, %v493
        %v496 = vsel %vm490, %v453, %v439
        %v497 = vsel %vm492, %v467, %v496
        %v498 = vsel %vm494, %v481, %v497
        %v501 = vadd.f32 %v394, %v495
        %v502 = vadd.f32 %v401, %v498
        %v503 = vsub.f32 %v394, %v495
        %v504 = vsub.f32 %v401, %v498
        %v507 = vrot.slane %v503, 4
        %v508 = vrot.slane %v504, 4
        %v511 = vsel %vm387, %v501, %v507
        %v512 = vsel %vm387, %v502, %v508
        %v513 = vadd.f32 %v355, %v366
        %v514 = vadd.f32 %v355, %v367
        %v515 = vadd.f32 %v355, %v368
        %v516 = vadd.f32 %v355, %v369
        %v517 = vsub.f32 %v355, %v366
        %v518 = vsub.f32 %v355, %v367
        %v519 = vsub.f32 %v355, %v368
        %v520 = vsub.f32 %v355, %v369
        %v529 = vcombine.high %v513, %v513
        %v530 = vcombine.high %v514, %v514
        %v531 = vcombine.high %v515, %v515
        %v532 = vcombine.high %v516, %v516
        %v533 = vcombine.high %v517, %v517
        %v534 = vcombine.high %v518, %v518
        %v535 = vcombine.high %v519, %v519
        %v536 = vcombine.high %v520, %v520
        %v545 = vsel %vm387, %v513, -inf
        %v546 = vrot.slane %v545, 4
        %v547 = vmax.f32 %v545, %v546
        %v548 = vrot.slane %v547, 2
        %v549 = vmax.f32 %v547, %v548
        %v550 = vrot.slane %v549, 1
        %v551 = vmax.f32 %v549, %v550
        %v552 = vsel %vm387, %v529, -inf
        %v553 = vrot.slane %v552, 4
        %v554 = vmax.f32 %v552, %v553
        %v555 = vrot.slane %v554, 2
        %v556 = vmax.f32 %v554, %v555
        %v557 = vrot.slane %v556, 1
        %v558 = vmax.f32 %v556, %v557
        %v559 = vsel %vm387, %v514, -inf
        %v560 = vrot.slane %v559, 4
        %v561 = vmax.f32 %v559, %v560
        %v562 = vrot.slane %v561, 2
        %v563 = vmax.f32 %v561, %v562
        %v564 = vrot.slane %v563, 1
        %v565 = vmax.f32 %v563, %v564
        %v566 = vsel %vm387, %v530, -inf
        %v567 = vrot.slane %v566, 4
        %v568 = vmax.f32 %v566, %v567
        %v569 = vrot.slane %v568, 2
        %v570 = vmax.f32 %v568, %v569
        %v571 = vrot.slane %v570, 1
        %v572 = vmax.f32 %v570, %v571
        %v573 = vsel %vm387, %v515, -inf
        %v574 = vrot.slane %v573, 4
        %v575 = vmax.f32 %v573, %v574
        %v576 = vrot.slane %v575, 2
        %v577 = vmax.f32 %v575, %v576
        %v578 = vrot.slane %v577, 1
        %v579 = vmax.f32 %v577, %v578
        %v580 = vsel %vm387, %v531, -inf
        %v581 = vrot.slane %v580, 4
        %v582 = vmax.f32 %v580, %v581
        %v583 = vrot.slane %v582, 2
        %v584 = vmax.f32 %v582, %v583
        %v585 = vrot.slane %v584, 1
        %v586 = vmax.f32 %v584, %v585
        %v587 = vsel %vm387, %v516, -inf
        %v588 = vrot.slane %v587, 4
        %v589 = vmax.f32 %v587, %v588
        %v590 = vrot.slane %v589, 2
        %v591 = vmax.f32 %v589, %v590
        %v592 = vrot.slane %v591, 1
        %v593 = vmax.f32 %v591, %v592
        %v594 = vsel %vm387, %v532, -inf
        %v595 = vrot.slane %v594, 4
        %v596 = vmax.f32 %v594, %v595
        %v597 = vrot.slane %v596, 2
        %v598 = vmax.f32 %v596, %v597
        %v599 = vrot.slane %v598, 1
        %v600 = vmax.f32 %v598, %v599
        %v601 = vsel %vm387, %v517, -inf
        %v602 = vrot.slane %v601, 4
        %v603 = vmax.f32 %v601, %v602
        %v604 = vrot.slane %v603, 2
        %v605 = vmax.f32 %v603, %v604
        %v606 = vrot.slane %v605, 1
        %v607 = vmax.f32 %v605, %v606
        %v608 = vsel %vm387, %v533, -inf
        %v609 = vrot.slane %v608, 4
        %v610 = vmax.f32 %v608, %v609
        %v611 = vrot.slane %v610, 2
        %v612 = vmax.f32 %v610, %v611
        %v613 = vrot.slane %v612, 1
        %v614 = vmax.f32 %v612, %v613
        %v615 = vsel %vm387, %v518, -inf
        %v616 = vrot.slane %v615, 4
        %v617 = vmax.f32 %v615, %v616
        %v618 = vrot.slane %v617, 2
        %v619 = vmax.f32 %v617, %v618
        %v620 = vrot.slane %v619, 1
        %v621 = vmax.f32 %v619, %v620
        %v622 = vsel %vm387, %v534, -inf
        %v623 = vrot.slane %v622, 4
        %v624 = vmax.f32 %v622, %v623
        %v625 = vrot.slane %v624, 2
        %v626 = vmax.f32 %v624, %v625
        %v627 = vrot.slane %v626, 1
        %v628 = vmax.f32 %v626, %v627
        %v629 = vsel %vm387, %v519, -inf
        %v630 = vrot.slane %v629, 4
        %v631 = vmax.f32 %v629, %v630
        %v632 = vrot.slane %v631, 2
        %v633 = vmax.f32 %v631, %v632
        %v634 = vrot.slane %v633, 1
        %v635 = vmax.f32 %v633, %v634
        %v636 = vsel %vm387, %v535, -inf
        %v637 = vrot.slane %v636, 4
        %v638 = vmax.f32 %v636, %v637
        %v639 = vrot.slane %v638, 2
        %v640 = vmax.f32 %v638, %v639
        %v641 = vrot.slane %v640, 1
        %v642 = vmax.f32 %v640, %v641
        %v643 = vsel %vm387, %v520, -inf
        %v644 = vrot.slane %v643, 4
        %v645 = vmax.f32 %v643, %v644
        %v646 = vrot.slane %v645, 2
        %v647 = vmax.f32 %v645, %v646
        %v648 = vrot.slane %v647, 1
        %v649 = vmax.f32 %v647, %v648
        %v650 = vsel %vm387, %v536, -inf
        %v651 = vrot.slane %v650, 4
        %v652 = vmax.f32 %v650, %v651
        %v653 = vrot.slane %v652, 2
        %v654 = vmax.f32 %v652, %v653
        %v655 = vrot.slane %v654, 1
        %v656 = vmax.f32 %v654, %v655
        %v673 = vcombine.low %v551, %v558
        %v674 = vcombine.low %v565, %v572
        %v675 = vcombine.low %v579, %v586
        %v676 = vcombine.low %v593, %v600
        %v677 = vcombine.low %v607, %v614
        %v678 = vcombine.low %v621, %v628
        %v679 = vcombine.low %v635, %v642
        %v680 = vcombine.low %v649, %v656
        %v689 = vsub.f32 %v513, %v673
        %v690 = vsub.f32 %v514, %v674
        %v691 = vsub.f32 %v515, %v675
        %v692 = vsub.f32 %v516, %v676
        %v693 = vsub.f32 %v517, %v677
        %v694 = vsub.f32 %v518, %v678
        %v695 = vsub.f32 %v519, %v679
        %v696 = vsub.f32 %v520, %v680
        %v697 = vmul.f32 %v689, 1.442695
        %v698 = vpow.pop %v697
        %v699 = vmul.f32 %v690, 1.442695
        %v700 = vpow.pop %v699
        %v701 = vmul.f32 %v691, 1.442695
        %v702 = vpow.pop %v701
        %v703 = vmul.f32 %v692, 1.442695
        %v704 = vpow.pop %v703
        %v705 = vmul.f32 %v693, 1.442695
        %v706 = vpow.pop %v705
        %v707 = vmul.f32 %v694, 1.442695
        %v708 = vpow.pop %v707
        %v709 = vmul.f32 %v695, 1.442695
        %v710 = vpow.pop %v709
        %v711 = vmul.f32 %v696, 1.442695
        %v712 = vpow.pop %v711
        %v721 = vcombine.high %v698, %v698
        %v722 = vcombine.high %v700, %v700
        %v723 = vcombine.high %v702, %v702
        %v724 = vcombine.high %v704, %v704
        %v725 = vcombine.high %v706, %v706
        %v726 = vcombine.high %v708, %v708
        %v727 = vcombine.high %v710, %v710
        %v728 = vcombine.high %v712, %v712
        %v737 = vsel %vm387, %v698, 0.0
        %v738 = vrot.slane %v737, 4
        %v739 = vadd.f32 %v737, %v738
        %v740 = vrot.slane %v739, 2
        %v741 = vadd.f32 %v739, %v740
        %v742 = vrot.slane %v741, 1
        %v743 = vadd.f32 %v741, %v742
        %v744 = vsel %vm387, %v721, 0.0
        %v745 = vrot.slane %v744, 4
        %v746 = vadd.f32 %v744, %v745
        %v747 = vrot.slane %v746, 2
        %v748 = vadd.f32 %v746, %v747
        %v749 = vrot.slane %v748, 1
        %v750 = vadd.f32 %v748, %v749
        %v751 = vsel %vm387, %v700, 0.0
        %v752 = vrot.slane %v751, 4
        %v753 = vadd.f32 %v751, %v752
        %v754 = vrot.slane %v753, 2
        %v755 = vadd.f32 %v753, %v754
        %v756 = vrot.slane %v755, 1
        %v757 = vadd.f32 %v755, %v756
        %v758 = vsel %vm387, %v722, 0.0
        %v759 = vrot.slane %v758, 4
        %v760 = vadd.f32 %v758, %v759
        %v761 = vrot.slane %v760, 2
        %v762 = vadd.f32 %v760, %v761
        %v763 = vrot.slane %v762, 1
        %v764 = vadd.f32 %v762, %v763
        %v765 = vsel %vm387, %v702, 0.0
        %v766 = vrot.slane %v765, 4
        %v767 = vadd.f32 %v765, %v766
        %v768 = vrot.slane %v767, 2
        %v769 = vadd.f32 %v767, %v768
        %v770 = vrot.slane %v769, 1
        %v771 = vadd.f32 %v769, %v770
        %v772 = vsel %vm387, %v723, 0.0
        %v773 = vrot.slane %v772, 4
        %v774 = vadd.f32 %v772, %v773
        %v775 = vrot.slane %v774, 2
        %v776 = vadd.f32 %v774, %v775
        %v777 = vrot.slane %v776, 1
        %v778 = vadd.f32 %v776, %v777
        %v779 = vsel %vm387, %v704, 0.0
        %v780 = vrot.slane %v779, 4
        %v781 = vadd.f32 %v779, %v780
        %v782 = vrot.slane %v781, 2
        %v783 = vadd.f32 %v781, %v782
        %v784 = vrot.slane %v783, 1
        %v785 = vadd.f32 %v783, %v784
        %v786 = vsel %vm387, %v724, 0.0
        %v787 = vrot.slane %v786, 4
        %v788 = vadd.f32 %v786, %v787
        %v789 = vrot.slane %v788, 2
        %v790 = vadd.f32 %v788, %v789
        %v791 = vrot.slane %v790, 1
        %v792 = vadd.f32 %v790, %v791
        %v793 = vsel %vm387, %v706, 0.0
        %v794 = vrot.slane %v793, 4
        %v795 = vadd.f32 %v793, %v794
        %v796 = vrot.slane %v795, 2
        %v797 = vadd.f32 %v795, %v796
        %v798 = vrot.slane %v797, 1
        %v799 = vadd.f32 %v797, %v798
        %v800 = vsel %vm387, %v725, 0.0
        %v801 = vrot.slane %v800, 4
        %v802 = vadd.f32 %v800, %v801
        %v803 = vrot.slane %v802, 2
        %v804 = vadd.f32 %v802, %v803
        %v805 = vrot.slane %v804, 1
        %v806 = vadd.f32 %v804, %v805
        %v807 = vsel %vm387, %v708, 0.0
        %v808 = vrot.slane %v807, 4
        %v809 = vadd.f32 %v807, %v808
        %v810 = vrot.slane %v809, 2
        %v811 = vadd.f32 %v809, %v810
        %v812 = vrot.slane %v811, 1
        %v813 = vadd.f32 %v811, %v812
        %v814 = vsel %vm387, %v726, 0.0
        %v815 = vrot.slane %v814, 4
        %v816 = vadd.f32 %v814, %v815
        %v817 = vrot.slane %v816, 2
        %v818 = vadd.f32 %v816, %v817
        %v819 = vrot.slane %v818, 1
        %v820 = vadd.f32 %v818, %v819
        %v821 = vsel %vm387, %v710, 0.0
        %v822 = vrot.slane %v821, 4
        %v823 = vadd.f32 %v821, %v822
        %v824 = vrot.slane %v823, 2
        %v825 = vadd.f32 %v823, %v824
        %v826 = vrot.slane %v825, 1
        %v827 = vadd.f32 %v825, %v826
        %v828 = vsel %vm387, %v727, 0.0
        %v829 = vrot.slane %v828, 4
        %v830 = vadd.f32 %v828, %v829
        %v831 = vrot.slane %v830, 2
        %v832 = vadd.f32 %v830, %v831
        %v833 = vrot.slane %v832, 1
        %v834 = vadd.f32 %v832, %v833
        %v835 = vsel %vm387, %v712, 0.0
        %v836 = vrot.slane %v835, 4
        %v837 = vadd.f32 %v835, %v836
        %v838 = vrot.slane %v837, 2
        %v839 = vadd.f32 %v837, %v838
        %v840 = vrot.slane %v839, 1
        %v841 = vadd.f32 %v839, %v840
        %v842 = vsel %vm387, %v728, 0.0
        %v843 = vrot.slane %v842, 4
        %v844 = vadd.f32 %v842, %v843
        %v845 = vrot.slane %v844, 2
        %v846 = vadd.f32 %v844, %v845
        %v847 = vrot.slane %v846, 1
        %v848 = vadd.f32 %v846, %v847
        %v849 = vlog2.pop %v743
        %v850 = vmul.f32 %v849, 0.6931472
        %v851 = vlog2.pop %v750
        %v852 = vmul.f32 %v851, 0.6931472
        %v853 = vlog2.pop %v757
        %v854 = vmul.f32 %v853, 0.6931472
        %v855 = vlog2.pop %v764
        %v856 = vmul.f32 %v855, 0.6931472
        %v857 = vlog2.pop %v771
        %v858 = vmul.f32 %v857, 0.6931472
        %v859 = vlog2.pop %v778
        %v860 = vmul.f32 %v859, 0.6931472
        %v861 = vlog2.pop %v785
        %v862 = vmul.f32 %v861, 0.6931472
        %v863 = vlog2.pop %v792
        %v864 = vmul.f32 %v863, 0.6931472
        %v865 = vlog2.pop %v799
        %v866 = vmul.f32 %v865, 0.6931472
        %v867 = vlog2.pop %v806
        %v868 = vmul.f32 %v867, 0.6931472
        %v869 = vlog2.pop %v813
        %v870 = vmul.f32 %v869, 0.6931472
        %v871 = vlog2.pop %v820
        %v872 = vmul.f32 %v871, 0.6931472
        %v873 = vlog2.pop %v827
        %v874 = vmul.f32 %v873, 0.6931472
        %v875 = vlog2.pop %v834
        %v876 = vmul.f32 %v875, 0.6931472
        %v877 = vlog2.pop %v841
        %v878 = vmul.f32 %v877, 0.6931472
        %v879 = vlog2.pop %v848
        %v880 = vmul.f32 %v879, 0.6931472
        %v881 = vadd.f32 %v551, %v850
        %v882 = vadd.f32 %v558, %v852
        %v883 = vadd.f32 %v565, %v854
        %v884 = vadd.f32 %v572, %v856
        %v885 = vadd.f32 %v579, %v858
        %v886 = vadd.f32 %v586, %v860
        %v887 = vadd.f32 %v593, %v862
        %v888 = vadd.f32 %v600, %v864
        %v889 = vadd.f32 %v607, %v866
        %v890 = vadd.f32 %v614, %v868
        %v891 = vadd.f32 %v621, %v870
        %v892 = vadd.f32 %v628, %v872
        %v893 = vadd.f32 %v635, %v874
        %v894 = vadd.f32 %v642, %v876
        %v895 = vadd.f32 %v649, %v878
        %v896 = vadd.f32 %v656, %v880
        %v913 = vsel %vm490, %v883, %v881
        %v914 = vsel %vm492, %v885, %v913
        %v915 = vsel %vm494, %v887, %v914
        %vm916 = vcmask 1044484
        %v917 = vsel %vm916, %v889, %v915
        %vm918 = vcmask 1045509
        %v919 = vsel %vm918, %v891, %v917
        %vm920 = vcmask 1046534
        %v921 = vsel %vm920, %v893, %v919
        %vm922 = vcmask 1047559
        %v923 = vsel %vm922, %v895, %v921
        %v924 = vsel %vm490, %v884, %v882
        %v925 = vsel %vm492, %v886, %v924
        %v926 = vsel %vm494, %v888, %v925
        %v927 = vsel %vm916, %v890, %v926
        %v928 = vsel %vm918, %v892, %v927
        %v929 = vsel %vm920, %v894, %v928
        %v930 = vsel %vm922, %v896, %v929
        %v933 = vsub.f32 %v511, %v923
        %v934 = vsub.f32 %v512, %v930
        %v935 = vld [vmem:[%s336] sm:$0xff]
        %v936 = vld [vmem:[%s336 + $0x8] sm:$0xff]
        %v937 = vadd.f32 %v935, %v933
        %v938 = vadd.f32 %v936, %v934
        %939 = vst [vmem:[%s336] sm:$0xff] %v937
        %940 = vst [vmem:[%s336 + $0x8] sm:$0xff] %v938
        %s941 = sand.u32 %s156, 1
        %s942 = scalar_lea.sflag [#allocation4], %s941
        %s943 = sand.u32 %s156, 1
        %s944 = smul.addr %s943, 16
        %s945 = scalar_lea.vmem [#allocation8], %s944
        // Predicated region
        $region53: #{tpu_custom_call.1} parent=35 // pred_check
          %p946 = pneg %p166
        $region54: #{tpu_custom_call.1} parent=35 // pred_check_branch
          %948 = sbr.rel (%p946) target = $region56
        $region55: #{tpu_custom_call.1} parent=35 // pred_region
          %s950 = ssub.s32 256, 256
          %951 = vsyncadd %s942, %s950
          %s952 = smul.addr %s28, 2
          %s953 = smul.addr %s952, 128
          %s954 = scalar_lea.hbm %s4, %s953
          %s956 = sshll.u32 %s945, 4
          %s957 = int_to_ptr.vmem [resolvable:$true] %s956
          %959 = dma.vmem_to_hbm [thread:$0]  %s957, 256, %s954, %s942
        $region56: #{tpu_custom_call.1} parent=35 // pred_fallthru
          _
      $region36: #{tpu_custom_call.1} parent=5 // pred_fallthru
        _
      %p960 = scmp.le.s32.totalorder 2, %s19
      // Predicated region
      $region57: #{tpu_custom_call.1} parent=5 // pred_check
        %p961 = pneg %p960
      $region58: #{tpu_custom_call.1} parent=5 // pred_check_branch
        %963 = sbr.rel (%p961) target = $region60
      $region59: #{tpu_custom_call.1} parent=5 // pred_region
        %s964 = ssub.s32 %s19, 2
        // Predicated region
        $region61: #{tpu_custom_call.1} parent=59 // pred_check
          %p965 = pneg %p172
        $region62: #{tpu_custom_call.1} parent=59 // pred_check_branch
          %967 = sbr.rel (%p965) target = $region64
        $region63: #{tpu_custom_call.1} parent=59 // pred_region
          %s968 = sand.u32 %s157, 1
          %s969 = scalar_lea.sflag [#allocation4], %s968
          %s970 = sand.u32 %s157, 1
          %s971 = smul.addr %s970, 16
          %s972 = scalar_lea.vmem [#allocation8], %s971
          %973 = dma.done %s969, 256
        $region64: #{tpu_custom_call.1} parent=59 // pred_fallthru
          _
      $region60: #{tpu_custom_call.1} parent=5 // pred_fallthru
        _
    $region6: #{tpu_custom_call.1} parent=1 // loop_footer
      %s23 = sadd.s32 1, %s19
    $region7: #{tpu_custom_call.1} parent=1 // loop_footer_branch
      %18 = sbr.rel target = $region3
    $region8: #{tpu_custom_call.1} parent=1 // loop_exit
      _
    %974 = vsyncpa [#allocation3], 1
    %s975 = scalar_lea.sflag [#allocation3], 1
    %976 = vsyncpa %s975, 1
    %977 = vsyncpa [#allocation6], 1
    %s978 = scalar_lea.sflag [#allocation6], 1
    %979 = vsyncpa %s978, 1
    %980 = vsyncpa [#allocation4], 1
    %s981 = scalar_lea.sflag [#allocation4], 1
    %982 = vsyncpa %s981, 1

</llo_original>
